<compile_context>
chip_gen: v5e
topology: v5e:2x2
jax: 0.10.0
libtpu: 0.0.40
codegen_flags: <defaults>
</compile_context>

<pallas_src>
import functools

import jax
import jax.numpy as jnp
from jax.experimental import pallas as pl
from jax.experimental.pallas import tpu as pltpu


_LANES = 128


def _global_avg_pool_kernel(x_ref, o_ref, acc_ref, *, inv_hw, hw, tile_hw):
    k = pl.program_id(1)           # hw-chunk (reduction) axis, last in grid
    nk = pl.num_programs(1)

    @pl.when(k == 0)
    def _init():
        acc_ref[...] = jnp.zeros_like(acc_ref)

    def accumulate(width):
        """Add `width` valid lanes of this chunk into the lane-dense f32 acc.

        `width` is a static Python int, so the group loop unrolls into pure
        VPU adds (per-group f32 upcast only; no full-tile f32 materialization).
        """
        groups = width // _LANES
        rem = width % _LANES
        if groups > 0:
            partial = x_ref[:, 0:_LANES].astype(jnp.float32)
            for g in range(1, groups):
                lo = g * _LANES
                partial = partial + x_ref[:, lo:lo + _LANES].astype(jnp.float32)
            acc_ref[...] += partial
        if rem > 0:
            # Ragged (<128-lane) remainder.  Only reachable on the last hw
            # chunk (or when the whole hw fits in one chunk), so this XLU
            # reduce runs at most once per row tile.
            acc_ref[:, 0:1] += jnp.sum(
                x_ref[:, groups * _LANES:width],
                axis=-1, keepdims=True, dtype=jnp.float32)

    tail = hw % tile_hw
    if tail == 0:
        # Uniform chunks: the hot loop is a pure load + add stream.
        accumulate(tile_hw)
    else:
        # Ragged last chunk: keep the unmasked path for k < last and only pay
        # for the short tail on the final chunk.
        @pl.when(k < nk - 1)
        def _body():
            accumulate(tile_hw)

        @pl.when(k == nk - 1)
        def _tail():
            accumulate(tail)

    @pl.when(k == nk - 1)
    def _finalize():
        # One cross-lane reduce per row tile, then scale and cast.
        total = jnp.sum(acc_ref[...], axis=-1, keepdims=True)
        o_ref[...] = (total * inv_hw).astype(o_ref.dtype)


def _round_up(x, m):
    return ((x + m - 1) // m) * m


def _vmem_capacity_bytes():
    try:
        return int(pltpu.get_tpu_info().vmem_capacity_bytes)
    except Exception:
        # Conservative fallback: v7x has the smallest per-TC VMEM (64 MiB).
        return 64 * 1024 * 1024


def _pick_tiles(rows, hw, itemsize, block_bytes):
    """Choose (tile_r, tile_hw) with one input block ~block_bytes.

    Constraints: tile_r multiple of the dtype's packed sublane count
    (8/16/32 for 4/2/1-byte dtypes) or == rows; tile_hw multiple of 128 or
    == hw.  Prefers a 128-multiple tile_hw that divides hw exactly (no ragged
    tail), and caps tile_r so there are >= 2 row blocks (v7x megacore).
    """
    sublane = {1: 32, 2: 16, 4: 8}.get(itemsize, 8)

    # --- hw (reduction / lane) axis ---
    if hw <= _LANES or hw * sublane * itemsize <= block_bytes:
        tile_hw = hw  # single reduction step
    else:
        max_hw = max(_LANES,
                     (block_bytes // (sublane * itemsize)) // _LANES * _LANES)
        max_hw = min(max_hw, (hw // _LANES) * _LANES)
        # Largest 128-multiple divisor of hw that fits -> uniform chunks.
        tile_hw = 0
        d = max_hw
        while d >= _LANES:
            if hw % d == 0:
                tile_hw = d
                break
            d -= _LANES
        if tile_hw == 0:
            tile_hw = max_hw  # fall back to a ragged (pl.when-gated) tail

    # --- row (parallel / sublane) axis ---
    tile_r = (block_bytes // (tile_hw * itemsize)) // sublane * sublane
    tile_r = max(sublane, tile_r)
    if rows >= 2 * sublane:
        # Guarantee >= 2 row blocks so the "parallel" axis can use both
        # TensorCores on v7x (no-op on single-TC v5e/v6e).
        half = _round_up(-(-rows // 2), sublane)
        tile_r = min(tile_r, half)
    tile_r = min(tile_r, _round_up(rows, sublane))
    if tile_r >= rows:
        tile_r = rows
    return tile_r, tile_hw


def pool_features(inp, *, target_block_bytes=None):
    """Reproduces PoolFeatures.forward.

    Returns (out, feature_maps):
      out          == inp                        (identity passthrough, no copy)
      feature_maps == F.avg_pool2d(inp, (H, W))  with shape (N, C, 1, 1)
    """
    N, C, H, W = inp.shape
    rows = N * C
    hw = H * W
    itemsize = jnp.dtype(inp.dtype).itemsize
    x2d = inp.reshape(rows, hw)

    vmem_cap = _vmem_capacity_bytes()
    if target_block_bytes is None:
        # ~8 MiB per input block (=> ~16 MiB double-buffered): big enough that
        # the ~0.35 us per-grid-step overhead is negligible next to the DMA,
        # small enough to stay well inside v7x's 64 MiB VMEM.
        target_block_bytes = min(8 * 1024 * 1024, vmem_cap // 6)

    tile_r, tile_hw = _pick_tiles(rows, hw, itemsize, target_block_bytes)
    grid = (pl.cdiv(rows, tile_r), pl.cdiv(hw, tile_hw))

    block_bytes = tile_r * tile_hw * itemsize
    # Double-buffered input + f32 acc scratch + output, plus slack.  Explicit
    # so large blocks compile on v5e (16 MiB scoped-VMEM default) and the
    # footprint stays bounded on v7x.
    vmem_limit = int(min(vmem_cap,
                         max(16 * 1024 * 1024,
                             2 * block_bytes + tile_r * _LANES * 4
                             + 2 * tile_r * itemsize + 4 * 1024 * 1024)))

    kernel = functools.partial(
        _global_avg_pool_kernel, inv_hw=1.0 / hw, hw=hw, tile_hw=tile_hw
    )

    pooled = pl.pallas_call(
        kernel,
        out_shape=jax.ShapeDtypeStruct((rows, 1), inp.dtype),
        grid_spec=pltpu.PrefetchScalarGridSpec(
            num_scalar_prefetch=0,
            grid=grid,
            # TODO(synk): sweep pipeline_mode=pl.Buffered(3) on v7x if DMA
            # handoff latency shows up at its higher HBM bandwidth.
            in_specs=[pl.BlockSpec((tile_r, tile_hw), lambda i, k: (i, k))],
            out_specs=pl.BlockSpec((tile_r, 1), lambda i, k: (i, 0)),
            scratch_shapes=[pltpu.VMEM((tile_r, _LANES), jnp.float32)],
        ),
        compiler_params=pltpu.CompilerParams(
            # Row blocks are independent (megacore-shardable on v7x);
            # hw chunks are the resident-output reduction axis.
            dimension_semantics=("parallel", "arbitrary"),
            vmem_limit_bytes=vmem_limit,
        ),
        cost_estimate=pl.CostEstimate(
            flops=rows * hw,
            transcendentals=0,
            bytes_accessed=rows * hw * itemsize + rows * itemsize,
        ),
    )(x2d)

    feature_maps = pooled.reshape(N, C, 1, 1)
    # The module returns the input unchanged; feature_maps is a side product.
    return inp, feature_maps


if __name__ == "__main__":
    # Case 1: small shape from the module spec (single block, grid (1, 1)).
    key = jax.random.PRNGKey(0)
    N, C, H, W = 2, 4, 16, 16
    x = jax.random.normal(key, (N, C, H, W), dtype=jnp.float32)

    out, feats = pool_features(x)
    out = jax.block_until_ready(out)
    feats = jax.block_until_ready(feats)

    ref_feats = jnp.mean(x, axis=(2, 3), keepdims=True)
    assert out.shape == x.shape
    assert feats.shape == (N, C, 1, 1)
    assert jnp.allclose(out, x)
    assert jnp.allclose(feats, ref_feats, atol=1e-6, rtol=1e-6)

    # Case 2: bf16 input with a deliberately tiny block budget to exercise the
    # tiled path (row tiling + hw-chunk reduction with a pl.when-gated ragged
    # last lane chunk: hw=576, tile_hw=256, tail=64).
    key2 = jax.random.PRNGKey(0)
    N2, C2, H2, W2 = 2, 16, 24, 24  # rows=32, hw=576
    x2 = jax.random.normal(key2, (N2, C2, H2, W2), dtype=jnp.bfloat16)

    out2, feats2 = pool_features(x2, target_block_bytes=8 * 1024)
    out2 = jax.block_until_ready(out2)
    feats2 = jax.block_until_ready(feats2)

    ref2 = jnp.mean(x2.astype(jnp.float32), axis=(2, 3), keepdims=True)
    assert out2.shape == x2.shape and feats2.shape == (N2, C2, 1, 1)
    assert jnp.allclose(out2, x2)
    assert jnp.allclose(feats2.astype(jnp.float32), ref2, atol=2e-2, rtol=2e-2)

    # Case 3: rows not a multiple of tile_r (partial last row block is clipped
    # on writeback) and hw < 128 (pure tail-reduce path).
    key3 = jax.random.PRNGKey(0)
    N3, C3, H3, W3 = 3, 4, 8, 8  # rows=12, hw=64
    x3 = jax.random.normal(key3, (N3, C3, H3, W3), dtype=jnp.float32)

    out3, feats3 = pool_features(x3, target_block_bytes=1024)
    out3 = jax.block_until_ready(out3)
    feats3 = jax.block_until_ready(feats3)

    ref3 = jnp.mean(x3, axis=(2, 3), keepdims=True)
    assert out3.shape == x3.shape and feats3.shape == (N3, C3, 1, 1)
    assert jnp.allclose(out3, x3)
    assert jnp.allclose(feats3, ref3, atol=1e-6, rtol=1e-6)

    print("KERNEL_OK")
</pallas_src>

<mosaic_0001>
module attributes {stable_mosaic.version = 11 : i64} {
  func.func @_global_avg_pool_kernel(%arg0: i32, %arg1: i32, %arg2: memref<8x256xf32, #tpu.memory_space<vmem>>, %arg3: memref<8x1xf32, #tpu.memory_space<vmem>>, %arg4: memref<8x128xf32, #tpu.memory_space<vmem>>) attributes {dimension_semantics = [#tpu.dimension_semantics<parallel>, #tpu.dimension_semantics<arbitrary>], iteration_bounds = array<i64: 1, 1>, scalar_prefetch = 0 : i64, scratch_operands = 1 : i64, tpu.core_type = #tpu.core_type<tc>, window_params = [{transform_indices = @transform_0, window_bounds = array<i64: 8, 256>}, {transform_indices = @transform_1, window_bounds = array<i64: 8, 1>}]} {
    %c0_i32 = arith.constant 0 : i32
    %0 = arith.cmpi eq, %arg1, %c0_i32 : i32
    %1 = arith.extui %0 : i1 to i32
    %c0_i32_0 = arith.constant 0 : i32
    %2 = arith.cmpi ne, %1, %c0_i32_0 : i32
    scf.if %2 {
      %cst = arith.constant 0.000000e+00 : f32
      %12 = vector.broadcast %cst : f32 to vector<8x128xf32>
      %c0_9 = arith.constant 0 : index
      %c0_10 = arith.constant 0 : index
      %13 = vector.load %arg4[%c0_9, %c0_10] : memref<8x128xf32, #tpu.memory_space<vmem>>, vector<8x128xf32>
      tpu.vector_store %arg4[%c0_9, %c0_10], %12 {strides = array<i32>} : memref<8x128xf32, #tpu.memory_space<vmem>>, vector<8x128xf32>,
    } else {
    }
    %c0 = arith.constant 0 : index
    %c0_1 = arith.constant 0 : index
    %3 = vector.load %arg2[%c0, %c0_1] : memref<8x256xf32, #tpu.memory_space<vmem>>, vector<8x128xf32>
    %c0_2 = arith.constant 0 : index
    %c128 = arith.constant 128 : index
    %4 = vector.load %arg2[%c0_2, %c128] : memref<8x256xf32, #tpu.memory_space<vmem>>, vector<8x128xf32>
    %5 = arith.addf %3, %4 : vector<8x128xf32>
    %c0_3 = arith.constant 0 : index
    %c0_4 = arith.constant 0 : index
    %6 = vector.load %arg4[%c0_3, %c0_4] : memref<8x128xf32, #tpu.memory_space<vmem>>, vector<8x128xf32>
    %7 = arith.addf %6, %5 : vector<8x128xf32>
    %c0_5 = arith.constant 0 : index
    %c0_6 = arith.constant 0 : index
    %8 = vector.load %arg4[%c0_5, %c0_6] : memref<8x128xf32, #tpu.memory_space<vmem>>, vector<8x128xf32>
    tpu.vector_store %arg4[%c0_5, %c0_6], %7 {strides = array<i32>} : memref<8x128xf32, #tpu.memory_space<vmem>>, vector<8x128xf32>,
    %c0_i32_7 = arith.constant 0 : i32
    %9 = arith.cmpi eq, %arg1, %c0_i32_7 : i32
    %10 = arith.extui %9 : i1 to i32
    %c0_i32_8 = arith.constant 0 : i32
    %11 = arith.cmpi ne, %10, %c0_i32_8 : i32
    scf.if %11 {
      %c0_9 = arith.constant 0 : index
      %c0_10 = arith.constant 0 : index
      %12 = vector.load %arg4[%c0_9, %c0_10] : memref<8x128xf32, #tpu.memory_space<vmem>>, vector<8x128xf32>
      %cst = arith.constant dense<0.000000e+00> : vector<8xf32>
      %13 = vector.multi_reduction <add>, %12, %cst [1] : vector<8x128xf32> to vector<8xf32>
      %14 = vector.shape_cast %13 : vector<8xf32> to vector<8x1xf32>
      %cst_11 = arith.constant 3.906250e-03 : f32
      %15 = vector.broadcast %cst_11 : f32 to vector<8x1xf32>
      %16 = arith.mulf %14, %15 : vector<8x1xf32>
      %c0_12 = arith.constant 0 : index
      %c0_13 = arith.constant 0 : index
      %17 = vector.load %arg3[%c0_12, %c0_13] : memref<8x1xf32, #tpu.memory_space<vmem>>, vector<8x1xf32>
      tpu.vector_store %arg3[%c0_12, %c0_13], %16 {strides = array<i32>} : memref<8x1xf32, #tpu.memory_space<vmem>>, vector<8x1xf32>,
    } else {
    }
    return
  }
  func.func @transform_0(%arg0: i32, %arg1: i32) -> (i32, i32) {
    %c0_i32 = arith.constant 0 : i32
    return %arg0, %arg1 : i32, i32
  }
  func.func @transform_1(%arg0: i32, %arg1: i32) -> (i32, i32) {
    %c0_i32 = arith.constant 0 : i32
    %c0_i32_0 = arith.constant 0 : i32
    return %arg0, %c0_i32 : i32, i32
  }
}

</mosaic_0001>

<llo_original>
// kernel: tpu_custom_call.1
$region0: #{tpu_custom_call.1}
  #allocation0 [shape = 'u32[]', space=smem, size = 0x4, offset = 0x4, fixed_abs, tag = 'smem constant byte address 0x4 - core index']
  #allocation1 [shape = 'u32[72,128]{1,0:T(1,128)}', space=vmem, size = 0x9000, scoped, tag = 'internal scratch']
  #allocation2 [shape = 'f32[8,128]{1,0:T(8,128)}', space=vmem, size = 0x1000, scoped, tag = 'scratch operand']
  %s0 = inlined_call_operand.hbm [shape: f32[8,256], index: 0, kind: input, shape index: {}]
  %s1 = inlined_call_operand.vmem [shape: f32[8,1], index: 1, kind: output, shape index: {}]
  %s2 = sld [smem:[#allocation0]]
  $region26: #{tpu_custom_call.1} parent=0
    _
  %s4 = ssub.s32 1, %s2
  %s5 = scalar_select 0, %s4, %s2
  $region1: #{tpu_custom_call.1} parent=0
    #allocation3 [shape = 'u8[8192]{0}', space=vmem, size = 0x2000, scoped, tag = 'input window, operand 0, single buffered']
    #allocation4 [shape = 's32[1]{0}', space=sflag, size = 0x4, scoped, tag = 'scoped memory for tpu_custom_call.1']
    %6 = vsyncpa [#allocation4], 0
    // Predicated region
    $region2: #{tpu_custom_call.1} parent=1 // pred_check
      _
    $region3: #{tpu_custom_call.1} parent=1 // pred_check_branch
      %8 = sbr.rel (0) target = $region5
    $region4: #{tpu_custom_call.1} parent=1 // pred_region
      %10 = vsyncadd [#allocation4], 0
      %s12 = sshll.u32 %s0, 4
      %s13 = int_to_ptr.hbm [resolvable:$true] %s12
      %s14 = sshll.u32 [#allocation3], 4
      %s15 = int_to_ptr.vmem [resolvable:$true] %s14
      %17 = dma.hbm_to_vmem [thread:$0]  %s13, 256, %s15, [#allocation4]
    $region5: #{tpu_custom_call.1} parent=1 // pred_fallthru
      _
    // Predicated region
    $region6: #{tpu_custom_call.1} parent=1 // pred_check
      _
    $region7: #{tpu_custom_call.1} parent=1 // pred_check_branch
      %19 = sbr.rel (0) target = $region9
    $region8: #{tpu_custom_call.1} parent=1 // pred_region
      %21 = dma.done [#allocation4], 256
    $region9: #{tpu_custom_call.1} parent=1 // pred_fallthru
      _
    %p22 = scmp.eq.s32.totalorder 0, 0
    // Predicated region
    $region10: #{tpu_custom_call.1} parent=1 // pred_check
      %p23 = pneg %p22
    $region11: #{tpu_custom_call.1} parent=1 // pred_check_branch
      %25 = sbr.rel (%p23) target = $region13
    $region12: #{tpu_custom_call.1} parent=1 // pred_region
      %26 = vst [vmem:[#allocation2] sm:$0xff] 0.0
    $region13: #{tpu_custom_call.1} parent=1 // pred_fallthru
      _
    %v27 = vld [vmem:[#allocation3] sm:$0xff]
    %v28 = vld [vmem:[#allocation3 + $0x8] sm:$0xff]
    %v29 = vadd.f32 %v27, %v28
    %v30 = vld [vmem:[#allocation2] sm:$0xff]
    %v31 = vadd.f32 %v30, %v29
    %32 = vst [vmem:[#allocation2] sm:$0xff] %v31
    // Predicated region
    $region14: #{tpu_custom_call.1} parent=1 // pred_check
      %p33 = pneg %p22
    $region15: #{tpu_custom_call.1} parent=1 // pred_check_branch
      %35 = sbr.rel (%p33) target = $region17
    $region16: #{tpu_custom_call.1} parent=1 // pred_region
      %v36 = vld [vmem:[#allocation2] sm:$0xff]
      %37 = vadd.xlane.f32.xlu0 %v36
      %v38 = vpop.xlane.xlu0 %37
      %v39 = vmul.f32 %v38, 0.00390625
      %vm40 = vcmask 7168
      %41 = vst.msk [vmem:[%s1] sm:$0xff] %vm40, %v39
    $region17: #{tpu_custom_call.1} parent=1 // pred_fallthru
      _
    // Predicated region
    $region18: #{tpu_custom_call.1} parent=1 // pred_check
      _
    $region19: #{tpu_custom_call.1} parent=1 // pred_check_branch
      %43 = sbr.rel (0) target = $region21
    $region20: #{tpu_custom_call.1} parent=1 // pred_region
      _
    $region21: #{tpu_custom_call.1} parent=1 // pred_fallthru
      _
    // Predicated region
    $region22: #{tpu_custom_call.1} parent=1 // pred_check
      _
    $region23: #{tpu_custom_call.1} parent=1 // pred_check_branch
      %45 = sbr.rel (0) target = $region25
    $region24: #{tpu_custom_call.1} parent=1 // pred_region
      _
    $region25: #{tpu_custom_call.1} parent=1 // pred_fallthru
      _
    %46 = vsyncpa [#allocation4], 1

</llo_original>
